<compile_context>
chip_gen: v7x
topology: tpu7x:2x2x1
jax: 0.10.0
libtpu: 0.0.40
codegen_flags: <defaults>
</compile_context>

<pallas_src>
import functools

import jax
import jax.numpy as jnp
from jax.experimental import pallas as pl
from jax.experimental.pallas import tpu as pltpu


def _round_up(x, m):
    return (x + m - 1) // m * m


def _pad2(a, rows, cols):
    r, c = a.shape
    if r == rows and c == cols:
        return a
    return jnp.pad(a, ((0, rows - r), (0, cols - c)))


def _answer_head_kernel(x_ref, w1_ref, b1_ref, g_ref, beta_ref, w2_ref, b2_ref,
                        out_ref, hn_ref, *, inter, eps):
    # ---- Stage 1 (Linear1 + GELU + LayerNorm): once per outer half ----
    @pl.when(pl.program_id(1) == 0)
    def _():
        # bf16 x bf16 -> f32 accumulate on the MXU.
        h = jnp.dot(x_ref[...], w1_ref[...],
                    preferred_element_type=jnp.float32) + b1_ref[...]

        # GELU (exact, erf-based, matching nn.GELU() default).
        h = 0.5 * h * (1.0 + jax.lax.erf(h * 0.7071067811865476))

        # LayerNorm over the true `inter` features, eps = 1e-12.
        # Padded columns of h are exactly zero (zero-padded W1 cols / b1 and
        # GELU(0)=0), so the sum is exact; only the variance needs the padded
        # lanes masked.  Zero-padded gamma/beta re-zero the padded hn lanes.
        inv_n = 1.0 / float(inter)
        mean = jnp.sum(h, axis=-1, keepdims=True) * inv_n
        centered = h - mean
        if h.shape[-1] != inter:
            col = jax.lax.broadcasted_iota(jnp.int32, centered.shape, 1)
            centered_sq = jnp.where(col < inter, centered, 0.0)
        else:
            centered_sq = centered
        var = jnp.sum(centered_sq * centered_sq, axis=-1, keepdims=True) * inv_n
        hn = centered * jax.lax.rsqrt(var + eps) * g_ref[...] + beta_ref[...]
        hn_ref[...] = hn.astype(jnp.bfloat16)

    # ---- Stage 2: this grid step's label tile (bf16 x bf16 -> f32) ----
    logits = jnp.dot(hn_ref[...], w2_ref[...],
                     preferred_element_type=jnp.float32) + b2_ref[...]
    out_ref[...] = logits.astype(out_ref.dtype)


def lxmert_visual_answer_head(hidden_states, params):
    """hidden_states: [B, H]. params: dict of (torch-transposed) weights."""
    B, H = hidden_states.shape
    w1, b1, gamma, beta, w2, b2 = (params["w1"], params["b1"], params["gamma"],
                                   params["beta"], params["w2"], params["b2"])
    inter = w1.shape[1]
    L = w2.shape[1]
    out_dtype = hidden_states.dtype
    out_itemsize = jnp.dtype(out_dtype).itemsize

    # Hardware-friendly padded shapes.
    Bp = _round_up(B, 16)        # bf16 sublane packing
    Hp = _round_up(H, 128)
    Ip = _round_up(inter, 128)

    # Fixed 512-wide label tiles (lane-dense, near-roofline W2 streaming).
    TN = 512
    Lp = _round_up(L, TN)
    num_tiles = Lp // TN
    # 2-way split of the label tiles when possible -> outer "parallel" axis
    # can be sharded across v7x's two TensorCores (stage 1 recomputed at most
    # twice).  On 1-TC chips this is just a sequential outer loop.
    outer = 2 if (num_tiles >= 2 and num_tiles % 2 == 0) else 1
    inner = num_tiles // outer

    x = _pad2(hidden_states, Bp, Hp).astype(jnp.bfloat16)
    w1p = _pad2(w1, Hp, Ip).astype(jnp.bfloat16)
    b1p = _pad2(b1, 1, Ip).astype(jnp.float32)
    gp = _pad2(gamma, 1, Ip).astype(jnp.float32)
    betap = _pad2(beta, 1, Ip).astype(jnp.float32)
    w2p = _pad2(w2, Ip, Lp).astype(jnp.bfloat16)
    b2p = _pad2(b2, 1, Lp).astype(jnp.float32)

    kernel = functools.partial(_answer_head_kernel, inter=inter, eps=1e-12)

    # Constant block index -> buffer stays VMEM-resident across the grid.
    resident = lambda shape: pl.BlockSpec(shape, lambda i, j: (0,) * len(shape))
    streamed = lambda shape: pl.BlockSpec(shape, lambda i, j: (0, i * inner + j))

    # VMEM budget from actual buffer sizes (double-buffered pipeline inputs /
    # outputs + the hn scratch), with 2x headroom, clamped to [16, 32] MiB.
    vmem_need = (
        2 * Bp * Hp * 2            # x
        + 2 * Hp * Ip * 2          # w1
        + 2 * 3 * Ip * 4           # b1, gamma, beta
        + 2 * Ip * TN * 2          # w2 stream
        + 2 * TN * 4               # b2 stream
        + 2 * Bp * TN * out_itemsize   # out tiles
        + Bp * Ip * 2              # hn scratch (bf16)
    )
    vmem_limit = int(min(max(2 * vmem_need, 16 * 1024 * 1024),
                         32 * 1024 * 1024))

    cost = pl.CostEstimate(
        flops=outer * 2 * Bp * Hp * Ip + 2 * Bp * Ip * Lp,
        transcendentals=outer * Bp * Ip,            # erf in the GELU
        bytes_accessed=(x.size + w1p.size + w2p.size) * 2
        + (b1p.size + gp.size + betap.size + b2p.size) * 4
        + Bp * Lp * out_itemsize,
    )

    out_padded = pl.pallas_call(
        kernel,
        out_shape=jax.ShapeDtypeStruct((Bp, Lp), out_dtype),
        grid_spec=pltpu.PrefetchScalarGridSpec(
            num_scalar_prefetch=0,
            grid=(outer, inner),
            in_specs=[
                resident((Bp, Hp)),        # x      (VMEM-resident)
                resident((Hp, Ip)),        # w1     (VMEM-resident)
                resident((1, Ip)),         # b1
                resident((1, Ip)),         # gamma
                resident((1, Ip)),         # beta
                streamed((Ip, TN)),        # w2     (streamed per label tile)
                streamed((1, TN)),         # b2
            ],
            out_specs=streamed((Bp, TN)),
            scratch_shapes=[pltpu.VMEM((Bp, Ip), jnp.bfloat16)],  # hn cache
        ),
        compiler_params=pltpu.CompilerParams(
            # outer halves are independent (megacore); inner tiles carry the
            # hn scratch -> sequential.
            dimension_semantics=("parallel", "arbitrary"),
            vmem_limit_bytes=vmem_limit,
        ),
        cost_estimate=cost,
    )(x, w1p, b1p, gp, betap, w2p, b2p)

    return out_padded[:B, :L]


def init_params(key, hid_dim, num_labels):
    """Deterministic synthetic params matching the torch module's shapes."""
    k1, k2, k3, k4 = jax.random.split(key, 4)
    inter = hid_dim * 2
    # torch Linear weight is [out, in]; we store the transpose [in, out].
    w1 = jax.random.normal(k1, (hid_dim, inter), jnp.float32) * 0.02
    b1 = jax.random.normal(k2, (1, inter), jnp.float32) * 0.01
    gamma = jnp.ones((1, inter), jnp.float32)
    beta = jnp.zeros((1, inter), jnp.float32)
    w2 = jax.random.normal(k3, (inter, num_labels), jnp.float32) * 0.02
    b2 = jax.random.normal(k4, (1, num_labels), jnp.float32) * 0.01
    return {"w1": w1, "b1": b1, "gamma": gamma, "beta": beta, "w2": w2, "b2": b2}


def _reference(hidden_states, p):
    h = hidden_states @ p["w1"] + p["b1"]
    h = jax.nn.gelu(h, approximate=False)
    mean = jnp.mean(h, axis=-1, keepdims=True)
    var = jnp.mean((h - mean) ** 2, axis=-1, keepdims=True)
    h = (h - mean) * jax.lax.rsqrt(var + 1e-12) * p["gamma"] + p["beta"]
    return h @ p["w2"] + p["b2"]


if __name__ == "__main__":
    key = jax.random.PRNGKey(0)
    k_in, k_p, k_in2, k_p2 = jax.random.split(key, 4)

    # Small shapes consistent with the module (hid_dim -> 2*hid_dim -> labels).
    B, HID, NUM_LABELS = 8, 32, 28
    hidden_states = jax.random.normal(k_in, (B, HID), jnp.float32)
    params = init_params(k_p, HID, NUM_LABELS)

    out = jax.block_until_ready(lxmert_visual_answer_head(hidden_states, params))
    ref = _reference(hidden_states, params)
    assert out.shape == (B, NUM_LABELS), out.shape
    # bf16 MXU operands with f32 accumulation -> looser tolerance vs the
    # pure-f32 reference.
    max_err = float(jnp.max(jnp.abs(out - ref)))
    assert jnp.allclose(out, ref, atol=3e-2, rtol=3e-2), f"max_err={max_err}"

    # Also exercise the multi-tile path (4 label tiles -> outer=2 halves).
    B2, HID2, L2 = 8, 64, 1500
    hs2 = jax.random.normal(k_in2, (B2, HID2), jnp.float32)
    params2 = init_params(k_p2, HID2, L2)
    out2 = jax.block_until_ready(lxmert_visual_answer_head(hs2, params2))
    ref2 = _reference(hs2, params2)
    assert out2.shape == (B2, L2), out2.shape
    max_err2 = float(jnp.max(jnp.abs(out2 - ref2)))
    assert jnp.allclose(out2, ref2, atol=3e-2, rtol=3e-2), f"max_err={max_err2}"

    print("KERNEL_OK")
</pallas_src>

<mosaic_0001>
module attributes {stable_mosaic.version = 11 : i64} {
  func.func @_answer_head_kernel(%arg0: i32, %arg1: i32, %arg2: memref<16x128xbf16, #tpu.memory_space<vmem>>, %arg3: memref<128x128xbf16, #tpu.memory_space<vmem>>, %arg4: memref<1x128xf32, #tpu.memory_space<vmem>>, %arg5: memref<1x128xf32, #tpu.memory_space<vmem>>, %arg6: memref<1x128xf32, #tpu.memory_space<vmem>>, %arg7: memref<128x512xbf16, #tpu.memory_space<vmem>>, %arg8: memref<1x512xf32, #tpu.memory_space<vmem>>, %arg9: memref<16x512xf32, #tpu.memory_space<vmem>>, %arg10: memref<16x128xbf16, #tpu.memory_space<vmem>>) attributes {dimension_semantics = [#tpu.dimension_semantics<parallel>, #tpu.dimension_semantics<arbitrary>], iteration_bounds = array<i64: 1, 1>, scalar_prefetch = 0 : i64, scratch_operands = 1 : i64, tpu.core_type = #tpu.core_type<tc>, window_params = [{pipeline_mode = #tpu.pipeline_mode<synchronous>, transform_indices = @transform_0, window_bounds = array<i64: 16, 128>}, {pipeline_mode = #tpu.pipeline_mode<synchronous>, transform_indices = @transform_1, window_bounds = array<i64: 128, 128>}, {pipeline_mode = #tpu.pipeline_mode<synchronous>, transform_indices = @transform_2, window_bounds = array<i64: 1, 128>}, {pipeline_mode = #tpu.pipeline_mode<synchronous>, transform_indices = @transform_3, window_bounds = array<i64: 1, 128>}, {pipeline_mode = #tpu.pipeline_mode<synchronous>, transform_indices = @transform_4, window_bounds = array<i64: 1, 128>}, {transform_indices = @transform_5, window_bounds = array<i64: 128, 512>}, {transform_indices = @transform_6, window_bounds = array<i64: 1, 512>}, {transform_indices = @transform_7, window_bounds = array<i64: 16, 512>}]} {
    %c0_i32 = arith.constant 0 : i32
    %0 = arith.cmpi eq, %arg1, %c0_i32 : i32
    %1 = arith.extui %0 : i1 to i32
    %c0_i32_0 = arith.constant 0 : i32
    %2 = arith.cmpi ne, %1, %c0_i32_0 : i32
    scf.if %2 {
      %c0_8 = arith.constant 0 : index
      %c0_9 = arith.constant 0 : index
      %10 = vector.load %arg2[%c0_8, %c0_9] : memref<16x128xbf16, #tpu.memory_space<vmem>>, vector<16x128xbf16>
      %c0_10 = arith.constant 0 : index
      %c0_11 = arith.constant 0 : index
      %11 = vector.load %arg3[%c0_10, %c0_11] : memref<128x128xbf16, #tpu.memory_space<vmem>>, vector<128x128xbf16>
      %cst_12 = arith.constant dense<0.000000e+00> : vector<16x128xf32>
      %12 = tpu.matmul %10, %11, %cst_12 {dimension_numbers = #tpu.dot_dimension_numbers<[1], [0], [0], [1], [0, 0, 1, 1], [], []>} : vector<16x128xbf16>, vector<128x128xbf16>, vector<16x128xf32> -> vector<16x128xf32>
      %c0_13 = arith.constant 0 : index
      %c0_14 = arith.constant 0 : index
      %13 = vector.load %arg4[%c0_13, %c0_14] : memref<1x128xf32, #tpu.memory_space<vmem>>, vector<1x128xf32>
      %14 = vector.broadcast %13 : vector<1x128xf32> to vector<16x128xf32>
      %15 = arith.addf %12, %14 : vector<16x128xf32>
      %cst_15 = arith.constant 5.000000e-01 : f32
      %16 = vector.broadcast %cst_15 : f32 to vector<16x128xf32>
      %17 = arith.mulf %16, %15 : vector<16x128xf32>
      %cst_16 = arith.constant 0.707106769 : f32
      %18 = vector.broadcast %cst_16 : f32 to vector<16x128xf32>
      %19 = arith.mulf %15, %18 : vector<16x128xf32>
      %20 = math.erf %19 : vector<16x128xf32>
      %cst_17 = arith.constant 1.000000e+00 : f32
      %21 = vector.broadcast %cst_17 : f32 to vector<16x128xf32>
      %22 = arith.addf %21, %20 : vector<16x128xf32>
      %23 = arith.mulf %17, %22 : vector<16x128xf32>
      %cst_18 = arith.constant dense<0.000000e+00> : vector<16xf32>
      %24 = vector.multi_reduction <add>, %23, %cst_18 [1] : vector<16x128xf32> to vector<16xf32>
      %25 = vector.shape_cast %24 : vector<16xf32> to vector<16x1xf32>
      %cst_19 = arith.constant 1.562500e-02 : f32
      %26 = vector.broadcast %cst_19 : f32 to vector<16x1xf32>
      %27 = arith.mulf %25, %26 : vector<16x1xf32>
      %28 = vector.broadcast %27 : vector<16x1xf32> to vector<16x128xf32>
      %29 = arith.subf %23, %28 : vector<16x128xf32>
      %30 = tpu.iota {dimensions = array<i32: 1>} : vector<16x128xi32>
      %c64_i32 = arith.constant 64 : i32
      %31 = vector.broadcast %c64_i32 : i32 to vector<16x128xi32>
      %32 = arith.cmpi slt, %30, %31 : vector<16x128xi32>
      %cst_20 = arith.constant 0.000000e+00 : f32
      %33 = vector.broadcast %cst_20 : f32 to vector<16x128xf32>
      %34 = arith.select %32, %29, %33 : vector<16x128xi1>, vector<16x128xf32>
      %35 = arith.mulf %34, %34 : vector<16x128xf32>
      %cst_21 = arith.constant dense<0.000000e+00> : vector<16xf32>
      %36 = vector.multi_reduction <add>, %35, %cst_21 [1] : vector<16x128xf32> to vector<16xf32>
      %37 = vector.shape_cast %36 : vector<16xf32> to vector<16x1xf32>
      %cst_22 = arith.constant 1.562500e-02 : f32
      %38 = vector.broadcast %cst_22 : f32 to vector<16x1xf32>
      %39 = arith.mulf %37, %38 : vector<16x1xf32>
      %cst_23 = arith.constant 9.99999996E-13 : f32
      %40 = vector.broadcast %cst_23 : f32 to vector<16x1xf32>
      %41 = arith.addf %39, %40 : vector<16x1xf32>
      %42 = math.rsqrt %41 : vector<16x1xf32>
      %43 = vector.broadcast %42 : vector<16x1xf32> to vector<16x128xf32>
      %44 = arith.mulf %29, %43 : vector<16x128xf32>
      %c0_24 = arith.constant 0 : index
      %c0_25 = arith.constant 0 : index
      %45 = vector.load %arg5[%c0_24, %c0_25] : memref<1x128xf32, #tpu.memory_space<vmem>>, vector<1x128xf32>
      %46 = vector.broadcast %45 : vector<1x128xf32> to vector<16x128xf32>
      %47 = arith.mulf %44, %46 : vector<16x128xf32>
      %c0_26 = arith.constant 0 : index
      %c0_27 = arith.constant 0 : index
      %48 = vector.load %arg6[%c0_26, %c0_27] : memref<1x128xf32, #tpu.memory_space<vmem>>, vector<1x128xf32>
      %49 = vector.broadcast %48 : vector<1x128xf32> to vector<16x128xf32>
      %50 = arith.addf %47, %49 : vector<16x128xf32>
      %51 = arith.truncf %50 : vector<16x128xf32> to vector<16x128xbf16>
      %c0_28 = arith.constant 0 : index
      %c0_29 = arith.constant 0 : index
      %52 = vector.load %arg10[%c0_28, %c0_29] : memref<16x128xbf16, #tpu.memory_space<vmem>>, vector<16x128xbf16>
      tpu.vector_store %arg10[%c0_28, %c0_29], %51 {strides = array<i32>} : memref<16x128xbf16, #tpu.memory_space<vmem>>, vector<16x128xbf16>,
    } else {
    }
    %c0 = arith.constant 0 : index
    %c0_1 = arith.constant 0 : index
    %3 = vector.load %arg10[%c0, %c0_1] : memref<16x128xbf16, #tpu.memory_space<vmem>>, vector<16x128xbf16>
    %c0_2 = arith.constant 0 : index
    %c0_3 = arith.constant 0 : index
    %4 = vector.load %arg7[%c0_2, %c0_3] : memref<128x512xbf16, #tpu.memory_space<vmem>>, vector<128x512xbf16>
    %cst = arith.constant dense<0.000000e+00> : vector<16x512xf32>
    %5 = tpu.matmul %3, %4, %cst {dimension_numbers = #tpu.dot_dimension_numbers<[1], [0], [0], [1], [0, 0, 1, 1], [], []>} : vector<16x128xbf16>, vector<128x512xbf16>, vector<16x512xf32> -> vector<16x512xf32>
    %c0_4 = arith.constant 0 : index
    %c0_5 = arith.constant 0 : index
    %6 = vector.load %arg8[%c0_4, %c0_5] : memref<1x512xf32, #tpu.memory_space<vmem>>, vector<1x512xf32>
    %7 = vector.broadcast %6 : vector<1x512xf32> to vector<16x512xf32>
    %8 = arith.addf %5, %7 : vector<16x512xf32>
    %c0_6 = arith.constant 0 : index
    %c0_7 = arith.constant 0 : index
    %9 = vector.load %arg9[%c0_6, %c0_7] : memref<16x512xf32, #tpu.memory_space<vmem>>, vector<16x512xf32>
    tpu.vector_store %arg9[%c0_6, %c0_7], %8 {strides = array<i32>} : memref<16x512xf32, #tpu.memory_space<vmem>>, vector<16x512xf32>,
    return
  }
  func.func @transform_0(%arg0: i32, %arg1: i32) -> (i32, i32) {
    %c0_i32 = arith.constant 0 : i32
    %c0_i32_0 = arith.constant 0 : i32
    %c0_i32_1 = arith.constant 0 : i32
    return %c0_i32, %c0_i32_0 : i32, i32
  }
  func.func @transform_1(%arg0: i32, %arg1: i32) -> (i32, i32) {
    %c0_i32 = arith.constant 0 : i32
    %c0_i32_0 = arith.constant 0 : i32
    %c0_i32_1 = arith.constant 0 : i32
    return %c0_i32, %c0_i32_0 : i32, i32
  }
  func.func @transform_2(%arg0: i32, %arg1: i32) -> (i32, i32) {
    %c0_i32 = arith.constant 0 : i32
    %c0_i32_0 = arith.constant 0 : i32
    %c0_i32_1 = arith.constant 0 : i32
    return %c0_i32, %c0_i32_0 : i32, i32
  }
  func.func @transform_3(%arg0: i32, %arg1: i32) -> (i32, i32) {
    %c0_i32 = arith.constant 0 : i32
    %c0_i32_0 = arith.constant 0 : i32
    %c0_i32_1 = arith.constant 0 : i32
    return %c0_i32, %c0_i32_0 : i32, i32
  }
  func.func @transform_4(%arg0: i32, %arg1: i32) -> (i32, i32) {
    %c0_i32 = arith.constant 0 : i32
    %c0_i32_0 = arith.constant 0 : i32
    %c0_i32_1 = arith.constant 0 : i32
    return %c0_i32, %c0_i32_0 : i32, i32
  }
  func.func @transform_5(%arg0: i32, %arg1: i32) -> (i32, i32) {
    %c1_i32 = arith.constant 1 : i32
    %0 = arith.muli %arg0, %c1_i32 : i32
    %1 = arith.addi %0, %arg1 : i32
    %c0_i32 = arith.constant 0 : i32
    %c0_i32_0 = arith.constant 0 : i32
    return %c0_i32, %1 : i32, i32
  }
  func.func @transform_6(%arg0: i32, %arg1: i32) -> (i32, i32) {
    %c1_i32 = arith.constant 1 : i32
    %0 = arith.muli %arg0, %c1_i32 : i32
    %1 = arith.addi %0, %arg1 : i32
    %c0_i32 = arith.constant 0 : i32
    %c0_i32_0 = arith.constant 0 : i32
    return %c0_i32, %1 : i32, i32
  }
  func.func @transform_7(%arg0: i32, %arg1: i32) -> (i32, i32) {
    %c1_i32 = arith.constant 1 : i32
    %0 = arith.muli %arg0, %c1_i32 : i32
    %1 = arith.addi %0, %arg1 : i32
    %c0_i32 = arith.constant 0 : i32
    %c0_i32_0 = arith.constant 0 : i32
    return %c0_i32, %1 : i32, i32
  }
}

</mosaic_0001>

<llo_original>
// kernel: tpu_custom_call.1
$region0: #{tpu_custom_call.1}
  #allocation0 [shape = 'u32[]', space=smem, size = 0x4, offset = 0x4, fixed_abs, tag = 'smem constant byte address 0x4 - core index']
  #allocation1 [shape = 'u32[144,128]{1,0:T(1,128)}', space=vmem, size = 0x12000, scoped, tag = 'internal scratch']
  #allocation2 [shape = 'bf16[16,128]{1,0:T(16,128)(2,1)}', space=vmem, size = 0x1000, scoped, tag = 'scratch operand']
  %s0 = inlined_call_operand.hbm [shape: bf16[16,128], index: 0, kind: input, shape index: {}]
  %s1 = inlined_call_operand.hbm [shape: bf16[128,128], index: 1, kind: input, shape index: {}]
  %s2 = inlined_call_operand.vmem [shape: f32[1,128], index: 2, kind: input, shape index: {}]
  %s3 = inlined_call_operand.vmem [shape: f32[1,128], index: 3, kind: input, shape index: {}]
  %s4 = inlined_call_operand.vmem [shape: f32[1,128], index: 4, kind: input, shape index: {}]
  %s5 = inlined_call_operand.hbm [shape: bf16[128,512], index: 5, kind: input, shape index: {}]
  %s6 = inlined_call_operand.vmem [shape: f32[1,512], index: 6, kind: input, shape index: {}]
  %s7 = inlined_call_operand.hbm [shape: f32[16,512], index: 7, kind: output, shape index: {}]
  %s8 = sld [smem:[#allocation0]]
  $region54: #{tpu_custom_call.1} parent=0
    _
  %s10 = ssub.s32 1, %s8
  %s11 = scalar_select 0, %s10, %s8
  $region1: #{tpu_custom_call.1} parent=0
    #allocation3 [shape = 'u8[4096]{0}', space=vmem, size = 0x1000, scoped, tag = 'input window, operand 0, single buffered']
    #allocation4 [shape = 's32[1]{0}', space=sflag, size = 0x4, scoped, tag = 'scoped memory for tpu_custom_call.1']
    #allocation5 [shape = 's32[1]{0}', space=sflag, size = 0x4, scoped, tag = 'scoped memory for tpu_custom_call.1']
    #allocation6 [shape = 'u8[32768]{0}', space=vmem, size = 0x8000, scoped, tag = 'input window, operand 1, single buffered']
    #allocation7 [shape = 's32[1]{0}', space=sflag, size = 0x4, scoped, tag = 'scoped memory for tpu_custom_call.1']
    #allocation8 [shape = 'u8[131072]{0}', space=vmem, size = 0x20000, scoped, tag = 'input window, operand 5, single buffered']
    #allocation9 [shape = 'u8[32768]{0}', space=vmem, size = 0x8000, scoped, tag = 'output window, operand 0, single buffered']
    %12 = vsyncpa [#allocation4], 0
    %13 = vsyncpa [#allocation7], 0
    %14 = vsyncpa [#allocation5], 0
    // Predicated region
    $region2: #{tpu_custom_call.1} parent=1 // pred_check
      _
    $region3: #{tpu_custom_call.1} parent=1 // pred_check_branch
      %16 = sbr.rel (0) target = $region5
    $region4: #{tpu_custom_call.1} parent=1 // pred_region
      %s18 = ssub.s32 128, 128
      %19 = vsyncadd [#allocation4], %s18
      %s20 = sshll.u32 [#allocation3], 4
      %s21 = int_to_ptr.vmem [resolvable:$true] %s20
      %26 = dma.hbm_to_vmem [thread:$0]  %s0, 128, %s21, [#allocation4], 64, 64, 4
    $region5: #{tpu_custom_call.1} parent=1 // pred_fallthru
      _
    // Predicated region
    $region6: #{tpu_custom_call.1} parent=1 // pred_check
      _
    $region7: #{tpu_custom_call.1} parent=1 // pred_check_branch
      %28 = sbr.rel (0) target = $region9
    $region8: #{tpu_custom_call.1} parent=1 // pred_region
      %s30 = ssub.s32 1024, 1024
      %31 = vsyncadd [#allocation7], %s30
      %s32 = sshll.u32 [#allocation6], 4
      %s33 = int_to_ptr.vmem [resolvable:$true] %s32
      %38 = dma.hbm_to_vmem [thread:$0]  %s1, 1024, %s33, [#allocation7], 64, 64, 4
    $region9: #{tpu_custom_call.1} parent=1 // pred_fallthru
      _
    // Predicated region
    $region10: #{tpu_custom_call.1} parent=1 // pred_check
      _
    $region11: #{tpu_custom_call.1} parent=1 // pred_check_branch
      %40 = sbr.rel (0) target = $region13
    $region12: #{tpu_custom_call.1} parent=1 // pred_region
      _
    $region13: #{tpu_custom_call.1} parent=1 // pred_fallthru
      _
    // Predicated region
    $region14: #{tpu_custom_call.1} parent=1 // pred_check
      _
    $region15: #{tpu_custom_call.1} parent=1 // pred_check_branch
      %42 = sbr.rel (0) target = $region17
    $region16: #{tpu_custom_call.1} parent=1 // pred_region
      _
    $region17: #{tpu_custom_call.1} parent=1 // pred_fallthru
      _
    // Predicated region
    $region18: #{tpu_custom_call.1} parent=1 // pred_check
      _
    $region19: #{tpu_custom_call.1} parent=1 // pred_check_branch
      %44 = sbr.rel (0) target = $region21
    $region20: #{tpu_custom_call.1} parent=1 // pred_region
      _
    $region21: #{tpu_custom_call.1} parent=1 // pred_fallthru
      _
    // Predicated region
    $region22: #{tpu_custom_call.1} parent=1 // pred_check
      _
    $region23: #{tpu_custom_call.1} parent=1 // pred_check_branch
      %46 = sbr.rel (0) target = $region25
    $region24: #{tpu_custom_call.1} parent=1 // pred_region
      %s47 = sadd.s32 0, 0
      %s48 = smul.u32 4, %s47
      %s50 = ssub.s32 4096, 4096
      %51 = vsyncadd [#allocation7], %s50
      %s52 = smul.addr %s48, 64
      %s53 = scalar_lea.hbm %s5, %s52
      %s54 = sshll.u32 [#allocation8], 4
      %s55 = int_to_ptr.vmem [resolvable:$true] %s54
      %60 = dma.hbm_to_vmem [thread:$0]  %s53, 4096, %s55, [#allocation7], 256, 256, 16
    $region25: #{tpu_custom_call.1} parent=1 // pred_fallthru
      _
    // Predicated region
    $region26: #{tpu_custom_call.1} parent=1 // pred_check
      _
    $region27: #{tpu_custom_call.1} parent=1 // pred_check_branch
      %62 = sbr.rel (0) target = $region29
    $region28: #{tpu_custom_call.1} parent=1 // pred_region
      %s63 = sadd.s32 0, 0
      %s64 = smul.u32 4, %s63
      %p65 = scmp.lt.s32.totalorder %s64, 3
      %s66 = scalar_select %p65, %s64, 3
      %s67 = scalar_lea.vmem %s6, %s66
      %s68 = sadd.s32 0, 0
      %s69 = smul.u32 4, %s68
    $region29: #{tpu_custom_call.1} parent=1 // pred_fallthru
      _
    // Predicated region
    $region30: #{tpu_custom_call.1} parent=1 // pred_check
      _
    $region31: #{tpu_custom_call.1} parent=1 // pred_check_branch
      %71 = sbr.rel (0) target = $region33
    $region32: #{tpu_custom_call.1} parent=1 // pred_region
      %72 = dma.done [#allocation4], 128
    $region33: #{tpu_custom_call.1} parent=1 // pred_fallthru
      _
    // Predicated region
    $region34: #{tpu_custom_call.1} parent=1 // pred_check
      _
    $region35: #{tpu_custom_call.1} parent=1 // pred_check_branch
      %74 = sbr.rel (0) target = $region37
    $region36: #{tpu_custom_call.1} parent=1 // pred_region
      %75 = dma.done [#allocation7], 1024
    $region37: #{tpu_custom_call.1} parent=1 // pred_fallthru
      _
    // Predicated region
    $region38: #{tpu_custom_call.1} parent=1 // pred_check
      _
    $region39: #{tpu_custom_call.1} parent=1 // pred_check_branch
      %77 = sbr.rel (0) target = $region41
    $region40: #{tpu_custom_call.1} parent=1 // pred_region
      %78 = dma.done [#allocation7], 4096
    $region41: #{tpu_custom_call.1} parent=1 // pred_fallthru
      _
    %s79 = sadd.s32 0, 0
    %s80 = smul.u32 4, %s79
    %p81 = scmp.lt.s32.totalorder %s80, 3
    %s82 = scalar_select %p81, %s80, 3
    %s83 = scalar_lea.vmem %s6, %s82
    %s84 = sadd.s32 0, 0
    %s85 = smul.u32 4, %s84
    %s86 = sadd.s32 0, 0
    %s87 = smul.u32 4, %s86
    %p88 = scmp.lt.s32.totalorder %s87, 3
    %s89 = scalar_select %p88, %s87, 3
    %s90 = scalar_lea.vmem %s6, %s89
    %s91 = sadd.s32 0, 0
    %s92 = smul.u32 4, %s91
    %s93 = sadd.s32 0, 0
    %s94 = smul.u32 4, %s93
    %p96 = scmp.eq.s32.totalorder 0, 0
    // Predicated region
    $region42: #{tpu_custom_call.1} parent=1 // pred_check
      %p97 = pneg %p96
    $region43: #{tpu_custom_call.1} parent=1 // pred_check_branch
      %99 = sbr.rel (%p97) target = $region45
    $region44: #{tpu_custom_call.1} parent=1 // pred_region
      %v100 = vld [vmem:[#allocation3] sm:$0xf]
      %v101 = vld [vmem:[#allocation3 + $0x4] sm:$0xf]
      %v102 = vld [vmem:[#allocation6] sm:$0xf]
      %v103 = vld [vmem:[#allocation6 + $0x4] sm:$0xf]
      %v104 = vld [vmem:[#allocation6 + $0x8] sm:$0xf]
      %v105 = vld [vmem:[#allocation6 + $0xc] sm:$0xf]
      %v106 = vld [vmem:[#allocation6 + $0x10] sm:$0xf]
      %v107 = vld [vmem:[#allocation6 + $0x14] sm:$0xf]
      %v108 = vld [vmem:[#allocation6 + $0x18] sm:$0xf]
      %v109 = vld [vmem:[#allocation6 + $0x1c] sm:$0xf]
      %v110 = vld [vmem:[#allocation6 + $0x20] sm:$0xf]
      %v111 = vld [vmem:[#allocation6 + $0x24] sm:$0xf]
      %v112 = vld [vmem:[#allocation6 + $0x28] sm:$0xf]
      %v113 = vld [vmem:[#allocation6 + $0x2c] sm:$0xf]
      %v114 = vld [vmem:[#allocation6 + $0x30] sm:$0xf]
      %v115 = vld [vmem:[#allocation6 + $0x34] sm:$0xf]
      %v116 = vld [vmem:[#allocation6 + $0x38] sm:$0xf]
      %v117 = vld [vmem:[#allocation6 + $0x3c] sm:$0xf]
      %v118 = vld [vmem:[%s2] sm:$0x1]
      %v120 = vlaneseq
      %v121 = vshrl.u32 %v120, 7
      %v122 = vsub.s32 0, %v121
      %v123 = vrot.slane %v118, %v122
      %v127 = vunpack.c.l.b16 %v100
      %v128 = vunpack.c.l.b16 %v101
      %v129 = vpack.c.b16 %v128, %v127
      %v147 = vunpack.c.l.b16 %v102
      %v148 = vunpack.c.l.b16 %v103
      %v149 = vunpack.c.l.b16 %v104
      %v150 = vunpack.c.l.b16 %v105
      %v151 = vunpack.c.l.b16 %v106
      %v152 = vunpack.c.l.b16 %v107
      %v153 = vunpack.c.l.b16 %v108
      %v154 = vunpack.c.l.b16 %v109
      %v155 = vunpack.c.l.b16 %v110
      %v156 = vunpack.c.l.b16 %v111
      %v157 = vunpack.c.l.b16 %v112
      %v158 = vunpack.c.l.b16 %v113
      %v159 = vunpack.c.l.b16 %v114
      %v160 = vunpack.c.l.b16 %v115
      %v161 = vunpack.c.l.b16 %v116
      %v162 = vunpack.c.l.b16 %v117
      %v163 = vpack.c.b16 %v148, %v147
      %v164 = vpack.c.b16 %v150, %v149
      %v165 = vpack.c.b16 %v152, %v151
      %v166 = vpack.c.b16 %v154, %v153
      %v167 = vpack.c.b16 %v156, %v155
      %v168 = vpack.c.b16 %v158, %v157
      %v169 = vpack.c.b16 %v160, %v159
      %v170 = vpack.c.b16 %v162, %v161
      %179 = vmatprep.subr.bf16.mxu0 0
      %180 = vmatpush1.bf16.msra.mxu0 %v163
      %181 = vmatprep.subr.bf16.mxu0 0
      %182 = vmatpush1.bf16.msra.mxu0 %v164
      %183 = vmatprep.subr.bf16.mxu0 0
      %184 = vmatpush1.bf16.msra.mxu0 %v165
      %185 = vmatprep.subr.bf16.mxu0 0
      %186 = vmatpush1.bf16.msra.mxu0 %v166
      %187 = vmatprep.subr.bf16.mxu0 0
      %188 = vmatpush1.bf16.msra.mxu0 %v167
      %189 = vmatprep.subr.bf16.mxu0 0
      %190 = vmatpush1.bf16.msra.mxu0 %v168
      %191 = vmatprep.subr.bf16.mxu0 0
      %192 = vmatpush1.bf16.msra.mxu0 %v169
      %193 = vmatprep.subr.bf16.mxu0 0
      %194 = vmatpush1.bf16.msra.mxu0 %v170
      %195 = vmatprep.subr.bf16.mxu0 0
      %196 = vmatpush1.bf16.msra.mxu0 0
      %197 = vmatprep.subr.bf16.mxu0 0
      %198 = vmatpush1.bf16.msra.mxu0 0
      %199 = vmatprep.subr.bf16.mxu0 0
      %200 = vmatpush1.bf16.msra.mxu0 0
      %201 = vmatprep.subr.bf16.mxu0 0
      %202 = vmatpush1.bf16.msra.mxu0 0
      %203 = vmatprep.subr.bf16.mxu0 0
      %204 = vmatpush1.bf16.msra.mxu0 0
      %205 = vmatprep.subr.bf16.mxu0 0
      %206 = vmatpush1.bf16.msra.mxu0 0
      %207 = vmatprep.subr.bf16.mxu0 0
      %208 = vmatpush1.bf16.msra.mxu0 0
      %209 = vmatprep.subr.bf16.mxu0 0
      %210 = vmatpush1.bf16.msra.mxu0 0
      %211 = vmatprep.mubr.bf16.mxu0 0
      %212 = vmatmul.mubr.bf16.gmra.mrb[0].mxu0 %v129
      %v213 = vpop.f32.mrb[0].mxu0
      %v214 = vadd.f32 %v123, %v213
      %v215 = vpop.f32.mrb[0].mxu0
      %v216 = vpop.f32.mrb[0].mxu0
      %v217 = vadd.f32 %v123, %v216
      %v218 = vpop.f32.mrb[0].mxu0
      %219 = vdwg.mxu0
      %v220 = vmul.f32 %v214, 0.5
      %v221 = vmul.f32 %v217, 0.5
      %v222 = vmul.f32 %v214, 0.70710677
      %v223 = vmul.f32 %v217, 0.70710677
      %v224 = verf.f32.pop %v222
      %v225 = verf.f32.pop %v223
      %v226 = vadd.f32 %v224, 1.0
      %v227 = vadd.f32 %v225, 1.0
      %v228 = vmul.f32 %v220, %v226
      %v229 = vmul.f32 %v221, %v227
      %230 = vadd.xlane.f32.xlu0 %v228
      %v231 = vpop.xlane.xlu0 %230
      %232 = vadd.xlane.f32.xlu0 %v229
      %v233 = vpop.xlane.xlu0 %232
      %v234 = vmul.f32 %v231, 0.015625
      %v235 = vmul.f32 %v233, 0.015625
      %v236 = vsub.f32 %v228, %v234
      %v237 = vsub.f32 %v229, %v235
      %v238 = vlaneseq
      %v239 = vand.u32 %v238, 127
      %vm240 = vcmp.lt.s32.totalorder %v239, 64
      %v241 = vsel %vm240, %v236, 0.0
      %v242 = vsel %vm240, %v237, 0.0
      %v243 = vmul.f32 %v241, %v241
      %v244 = vmul.f32 %v242, %v242
      %245 = vadd.xlane.f32.xlu0 %v243
      %v246 = vpop.xlane.xlu0 %245
      %247 = vadd.xlane.f32.xlu0 %v244
      %v248 = vpop.xlane.xlu0 %247
      %v249 = vmul.f32 %v246, 0.015625
      %v250 = vmul.f32 %v248, 0.015625
      %v251 = vadd.f32 %v249, 1e-12
      %v252 = vadd.f32 %v250, 1e-12
      %v253 = vrsqrt.pop %v251
      %v254 = vrsqrt.pop %v252
      %v255 = vmul.f32 %v236, %v253
      %v256 = vmul.f32 %v237, %v254
      %v257 = vld [vmem:[%s3] sm:$0x1]
      %v259 = vlaneseq
      %v260 = vshrl.u32 %v259, 7
      %v261 = vsub.s32 0, %v260
      %v262 = vrot.slane %v257, %v261
      %v264 = vmul.f32 %v255, %v262
      %v265 = vmul.f32 %v256, %v262
      %v266 = vld [vmem:[%s4] sm:$0x1]
      %v268 = vlaneseq
      %v269 = vshrl.u32 %v268, 7
      %v270 = vsub.s32 0, %v269
      %v271 = vrot.slane %v266, %v270
      %v273 = vadd.f32 %v264, %v271
      %v274 = vadd.f32 %v265, %v271
      %v275 = vpack.c.bf16 %v274, %v273
      %276 = vst [vmem:[#allocation2] sm:$0xff] %v275
    $region45: #{tpu_custom_call.1} parent=1 // pred_fallthru
      _
    %v277 = vld [vmem:[#allocation2] sm:$0xff]
    %v278 = vld [vmem:[#allocation8] sm:$0xff]
    %v279 = vld [vmem:[#allocation8 + $0x8] sm:$0xff]
    %v280 = vld [vmem:[#allocation8 + $0x10] sm:$0xff]
    %v281 = vld [vmem:[#allocation8 + $0x18] sm:$0xff]
    %v282 = vld [vmem:[#allocation8 + $0x20] sm:$0xff]
    %v283 = vld [vmem:[#allocation8 + $0x28] sm:$0xff]
    %v284 = vld [vmem:[#allocation8 + $0x30] sm:$0xff]
    %v285 = vld [vmem:[#allocation8 + $0x38] sm:$0xff]
    %v286 = vld [vmem:[#allocation8 + $0x40] sm:$0xff]
    %v287 = vld [vmem:[#allocation8 + $0x48] sm:$0xff]
    %v288 = vld [vmem:[#allocation8 + $0x50] sm:$0xff]
    %v289 = vld [vmem:[#allocation8 + $0x58] sm:$0xff]
    %v290 = vld [vmem:[#allocation8 + $0x60] sm:$0xff]
    %v291 = vld [vmem:[#allocation8 + $0x68] sm:$0xff]
    %v292 = vld [vmem:[#allocation8 + $0x70] sm:$0xff]
    %v293 = vld [vmem:[#allocation8 + $0x78] sm:$0xff]
    %v294 = vld [vmem:[#allocation8 + $0x80] sm:$0xff]
    %v295 = vld [vmem:[#allocation8 + $0x88] sm:$0xff]
    %v296 = vld [vmem:[#allocation8 + $0x90] sm:$0xff]
    %v297 = vld [vmem:[#allocation8 + $0x98] sm:$0xff]
    %v298 = vld [vmem:[#allocation8 + $0xa0] sm:$0xff]
    %v299 = vld [vmem:[#allocation8 + $0xa8] sm:$0xff]
    %v300 = vld [vmem:[#allocation8 + $0xb0] sm:$0xff]
    %v301 = vld [vmem:[#allocation8 + $0xb8] sm:$0xff]
    %v302 = vld [vmem:[#allocation8 + $0xc0] sm:$0xff]
    %v303 = vld [vmem:[#allocation8 + $0xc8] sm:$0xff]
    %v304 = vld [vmem:[#allocation8 + $0xd0] sm:$0xff]
    %v305 = vld [vmem:[#allocation8 + $0xd8] sm:$0xff]
    %v306 = vld [vmem:[#allocation8 + $0xe0] sm:$0xff]
    %v307 = vld [vmem:[#allocation8 + $0xe8] sm:$0xff]
    %v308 = vld [vmem:[#allocation8 + $0xf0] sm:$0xff]
    %v309 = vld [vmem:[#allocation8 + $0xf8] sm:$0xff]
    %v310 = vld [vmem:[%s90] sm:$0xf]
    %v312 = vlaneseq
    %v313 = vshrl.u32 %v312, 7
    %v314 = vsub.s32 0, %v313
    %v315 = vrot.slane %v310, %v314
    %v316 = vlaneseq
    %v317 = vshrl.u32 %v316, 7
    %v318 = vsub.s32 1, %v317
    %v319 = vrot.slane %v310, %v318
    %v320 = vlaneseq
    %v321 = vshrl.u32 %v320, 7
    %v322 = vsub.s32 2, %v321
    %v323 = vrot.slane %v310, %v322
    %v324 = vlaneseq
    %v325 = vshrl.u32 %v324, 7
    %v326 = vsub.s32 3, %v325
    %v327 = vrot.slane %v310, %v326
    %v364 = vunpack.c.l.b16 %v278
    %v365 = vunpack.c.h.b16 %v278
    %v366 = vunpack.c.l.b16 %v279
    %v367 = vunpack.c.h.b16 %v279
    %v368 = vunpack.c.l.b16 %v280
    %v369 = vunpack.c.h.b16 %v280
    %v370 = vunpack.c.l.b16 %v281
    %v371 = vunpack.c.h.b16 %v281
    %v372 = vunpack.c.l.b16 %v282
    %v373 = vunpack.c.h.b16 %v282
    %v374 = vunpack.c.l.b16 %v283
    %v375 = vunpack.c.h.b16 %v283
    %v376 = vunpack.c.l.b16 %v284
    %v377 = vunpack.c.h.b16 %v284
    %v378 = vunpack.c.l.b16 %v285
    %v379 = vunpack.c.h.b16 %v285
    %v380 = vunpack.c.l.b16 %v286
    %v381 = vunpack.c.h.b16 %v286
    %v382 = vunpack.c.l.b16 %v287
    %v383 = vunpack.c.h.b16 %v287
    %v384 = vunpack.c.l.b16 %v288
    %v385 = vunpack.c.h.b16 %v288
    %v386 = vunpack.c.l.b16 %v289
    %v387 = vunpack.c.h.b16 %v289
    %v388 = vunpack.c.l.b16 %v290
    %v389 = vunpack.c.h.b16 %v290
    %v390 = vunpack.c.l.b16 %v291
    %v391 = vunpack.c.h.b16 %v291
    %v392 = vunpack.c.l.b16 %v292
    %v393 = vunpack.c.h.b16 %v292
    %v394 = vunpack.c.l.b16 %v293
    %v395 = vunpack.c.h.b16 %v293
    %v396 = vunpack.c.l.b16 %v294
    %v397 = vunpack.c.h.b16 %v294
    %v398 = vunpack.c.l.b16 %v295
    %v399 = vunpack.c.h.b16 %v295
    %v400 = vunpack.c.l.b16 %v296
    %v401 = vunpack.c.h.b16 %v296
    %v402 = vunpack.c.l.b16 %v297
    %v403 = vunpack.c.h.b16 %v297
    %v404 = vunpack.c.l.b16 %v298
    %v405 = vunpack.c.h.b16 %v298
    %v406 = vunpack.c.l.b16 %v299
    %v407 = vunpack.c.h.b16 %v299
    %v408 = vunpack.c.l.b16 %v300
    %v409 = vunpack.c.h.b16 %v300
    %v410 = vunpack.c.l.b16 %v301
    %v411 = vunpack.c.h.b16 %v301
    %v412 = vunpack.c.l.b16 %v302
    %v413 = vunpack.c.h.b16 %v302
    %v414 = vunpack.c.l.b16 %v303
    %v415 = vunpack.c.h.b16 %v303
    %v416 = vunpack.c.l.b16 %v304
    %v417 = vunpack.c.h.b16 %v304
    %v418 = vunpack.c.l.b16 %v305
    %v419 = vunpack.c.h.b16 %v305
    %v420 = vunpack.c.l.b16 %v306
    %v421 = vunpack.c.h.b16 %v306
    %v422 = vunpack.c.l.b16 %v307
    %v423 = vunpack.c.h.b16 %v307
    %v424 = vunpack.c.l.b16 %v308
    %v425 = vunpack.c.h.b16 %v308
    %v426 = vunpack.c.l.b16 %v309
    %v427 = vunpack.c.h.b16 %v309
    %v428 = vpack.c.b16 %v368, %v364
    %v429 = vpack.c.b16 %v369, %v365
    %v430 = vpack.c.b16 %v370, %v366
    %v431 = vpack.c.b16 %v371, %v367
    %v432 = vpack.c.b16 %v376, %v372
    %v433 = vpack.c.b16 %v377, %v373
    %v434 = vpack.c.b16 %v378, %v374
    %v435 = vpack.c.b16 %v379, %v375
    %v436 = vpack.c.b16 %v384, %v380
    %v437 = vpack.c.b16 %v385, %v381
    %v438 = vpack.c.b16 %v386, %v382
    %v439 = vpack.c.b16 %v387, %v383
    %v440 = vpack.c.b16 %v392, %v388
    %v441 = vpack.c.b16 %v393, %v389
    %v442 = vpack.c.b16 %v394, %v390
    %v443 = vpack.c.b16 %v395, %v391
    %v444 = vpack.c.b16 %v400, %v396
    %v445 = vpack.c.b16 %v401, %v397
    %v446 = vpack.c.b16 %v402, %v398
    %v447 = vpack.c.b16 %v403, %v399
    %v448 = vpack.c.b16 %v408, %v404
    %v449 = vpack.c.b16 %v409, %v405
    %v450 = vpack.c.b16 %v410, %v406
    %v451 = vpack.c.b16 %v411, %v407
    %v452 = vpack.c.b16 %v416, %v412
    %v453 = vpack.c.b16 %v417, %v413
    %v454 = vpack.c.b16 %v418, %v414
    %v455 = vpack.c.b16 %v419, %v415
    %v456 = vpack.c.b16 %v424, %v420
    %v457 = vpack.c.b16 %v425, %v421
    %v458 = vpack.c.b16 %v426, %v422
    %v459 = vpack.c.b16 %v427, %v423
    %492 = vmatprep.subr.bf16.mxu0 %v429
    %493 = vmatpush1.bf16.msra.mxu0 %v428
    %494 = vmatprep.subr.bf16.mxu0 %v433
    %495 = vmatpush1.bf16.msra.mxu0 %v432
    %496 = vmatprep.subr.bf16.mxu0 %v437
    %497 = vmatpush1.bf16.msra.mxu0 %v436
    %498 = vmatprep.subr.bf16.mxu0 %v441
    %499 = vmatpush1.bf16.msra.mxu0 %v440
    %500 = vmatprep.subr.bf16.mxu0 %v445
    %501 = vmatpush1.bf16.msra.mxu0 %v444
    %502 = vmatprep.subr.bf16.mxu0 %v449
    %503 = vmatpush1.bf16.msra.mxu0 %v448
    %504 = vmatprep.subr.bf16.mxu0 %v453
    %505 = vmatpush1.bf16.msra.mxu0 %v452
    %506 = vmatprep.subr.bf16.mxu0 %v457
    %507 = vmatpush1.bf16.msra.mxu0 %v456
    %508 = vmatprep.subr.bf16.mxu0 0
    %509 = vmatpush1.bf16.msra.mxu0 0
    %510 = vmatprep.subr.bf16.mxu0 0
    %511 = vmatpush1.bf16.msra.mxu0 0
    %512 = vmatprep.subr.bf16.mxu0 0
    %513 = vmatpush1.bf16.msra.mxu0 0
    %514 = vmatprep.subr.bf16.mxu0 0
    %515 = vmatpush1.bf16.msra.mxu0 0
    %516 = vmatprep.subr.bf16.mxu0 0
    %517 = vmatpush1.bf16.msra.mxu0 0
    %518 = vmatprep.subr.bf16.mxu0 0
    %519 = vmatpush1.bf16.msra.mxu0 0
    %520 = vmatprep.subr.bf16.mxu0 0
    %521 = vmatpush1.bf16.msra.mxu0 0
    %522 = vmatprep.subr.bf16.mxu0 0
    %523 = vmatpush1.bf16.msra.mxu0 0
    %524 = vmatprep.mubr.bf16.mxu0 0
    %525 = vmatmul.mubr.bf16.gmra.mrb[0].mxu0 %v277
    %v526 = vpop.f32.mrb[0].mxu0
    %v527 = vadd.f32 %v315, %v526
    %v528 = vpop.f32.mrb[0].mxu0
    %v529 = vadd.f32 %v319, %v528
    %v530 = vpop.f32.mrb[0].mxu0
    %v531 = vadd.f32 %v315, %v530
    %v532 = vpop.f32.mrb[0].mxu0
    %v533 = vadd.f32 %v319, %v532
    %534 = vdwg.mxu0
    %535 = vmatprep.subr.bf16.mxu0 %v431
    %536 = vmatpush1.bf16.msra.mxu0 %v430
    %537 = vmatprep.subr.bf16.mxu0 %v435
    %538 = vmatpush1.bf16.msra.mxu0 %v434
    %539 = vmatprep.subr.bf16.mxu0 %v439
    %540 = vmatpush1.bf16.msra.mxu0 %v438
    %541 = vmatprep.subr.bf16.mxu0 %v443
    %542 = vmatpush1.bf16.msra.mxu0 %v442
    %543 = vmatprep.subr.bf16.mxu0 %v447
    %544 = vmatpush1.bf16.msra.mxu0 %v446
    %545 = vmatprep.subr.bf16.mxu0 %v451
    %546 = vmatpush1.bf16.msra.mxu0 %v450
    %547 = vmatprep.subr.bf16.mxu0 %v455
    %548 = vmatpush1.bf16.msra.mxu0 %v454
    %549 = vmatprep.subr.bf16.mxu0 %v459
    %550 = vmatpush1.bf16.msra.mxu0 %v458
    %551 = vmatprep.subr.bf16.mxu0 0
    %552 = vmatpush1.bf16.msra.mxu0 0
    %553 = vmatprep.subr.bf16.mxu0 0
    %554 = vmatpush1.bf16.msra.mxu0 0
    %555 = vmatprep.subr.bf16.mxu0 0
    %556 = vmatpush1.bf16.msra.mxu0 0
    %557 = vmatprep.subr.bf16.mxu0 0
    %558 = vmatpush1.bf16.msra.mxu0 0
    %559 = vmatprep.subr.bf16.mxu0 0
    %560 = vmatpush1.bf16.msra.mxu0 0
    %561 = vmatprep.subr.bf16.mxu0 0
    %562 = vmatpush1.bf16.msra.mxu0 0
    %563 = vmatprep.subr.bf16.mxu0 0
    %564 = vmatpush1.bf16.msra.mxu0 0
    %565 = vmatprep.subr.bf16.mxu0 0
    %566 = vmatpush1.bf16.msra.mxu0 0
    %567 = vmatprep.mubr.bf16.mxu0 0
    %568 = vmatmul.mubr.bf16.gmra.mrb[0].mxu0 %v277
    %v569 = vpop.f32.mrb[0].mxu0
    %v570 = vadd.f32 %v323, %v569
    %v571 = vpop.f32.mrb[0].mxu0
    %v572 = vadd.f32 %v327, %v571
    %v573 = vpop.f32.mrb[0].mxu0
    %v574 = vadd.f32 %v323, %v573
    %v575 = vpop.f32.mrb[0].mxu0
    %v576 = vadd.f32 %v327, %v575
    %577 = vdwg.mxu0
    %578 = vst [vmem:[#allocation9] sm:$0xff] %v527
    %579 = vst [vmem:[#allocation9 + $0x8] sm:$0xff] %v529
    %580 = vst [vmem:[#allocation9 + $0x10] sm:$0xff] %v570
    %581 = vst [vmem:[#allocation9 + $0x18] sm:$0xff] %v572
    %582 = vst [vmem:[#allocation9 + $0x20] sm:$0xff] %v531
    %583 = vst [vmem:[#allocation9 + $0x28] sm:$0xff] %v533
    %584 = vst [vmem:[#allocation9 + $0x30] sm:$0xff] %v574
    %585 = vst [vmem:[#allocation9 + $0x38] sm:$0xff] %v576
    // Predicated region
    $region46: #{tpu_custom_call.1} parent=1 // pred_check
      _
    $region47: #{tpu_custom_call.1} parent=1 // pred_check_branch
      %587 = sbr.rel (0) target = $region49
    $region48: #{tpu_custom_call.1} parent=1 // pred_region
      %s588 = sadd.s32 0, 0
      %s589 = smul.u32 4, %s588
      %s591 = ssub.s32 1024, 1024
      %592 = vsyncadd [#allocation5], %s591
      %s593 = smul.addr %s589, 128
      %s594 = scalar_lea.hbm %s7, %s593
      %s595 = sshll.u32 [#allocation9], 4
      %s596 = int_to_ptr.vmem [resolvable:$true] %s595
      %601 = dma.vmem_to_hbm [thread:$0]  %s596, 1024, %s594, [#allocation5], 512, 512, 32
    $region49: #{tpu_custom_call.1} parent=1 // pred_fallthru
      _
    // Predicated region
    $region50: #{tpu_custom_call.1} parent=1 // pred_check
      _
    $region51: #{tpu_custom_call.1} parent=1 // pred_check_branch
      %603 = sbr.rel (0) target = $region53
    $region52: #{tpu_custom_call.1} parent=1 // pred_region
      %604 = dma.done [#allocation5], 1024
    $region53: #{tpu_custom_call.1} parent=1 // pred_fallthru
      _
    %605 = vsyncpa [#allocation4], 1
    %606 = vsyncpa [#allocation7], 1
    %607 = vsyncpa [#allocation5], 1

</llo_original>
